<compile_context>
chip_gen: v5e
topology: v5e:2x2
jax: 0.10.0
libtpu: 0.0.40
codegen_flags: <defaults>
</compile_context>

<pallas_src>
import jax
import jax.numpy as jnp
from jax import lax
from jax.experimental import pallas as pl
from jax.experimental.pallas import tpu as pltpu


def latent_forward(x_nchw, weight, bias, eps_nchw, *, kernel_size, padding,
                   out_dtype=jnp.float32):
    """x_nchw: (N, Cin, H, W); weight: (2*Cout, Cin, K, K); bias: (2*Cout,);
    eps_nchw: (N, Cout, H, W) standard-normal noise (reparameterized sample).
    Returns (latent, gaussian_params), both NCHW, matching the PyTorch module
    (no_features == Cin == Cout).  out_dtype lets a consumer request bf16
    outputs to halve HBM write-back; default f32 matches the module exactly."""
    N, Cin, H, W = x_nchw.shape
    K = kernel_size
    P = padding
    Cout2 = weight.shape[0]
    Cout = Cout2 // 2
    HW = H * W                      # 256 here -> multiple of 128 (unmasked stores)
    Kdim = Cin * K * K              # contraction dim (100 here)

    # ---- wrapper glue (all cheap): one fused im2col conv + free reshapes ----
    # conv_general_dilated_patches orders the patch feature dim as (c, kh, kw),
    # i.e. index = c*K*K + kh*K + kw, which matches weight.reshape(2C, Cin*K*K)
    # directly (no transpose needed).  bf16 input -> exact bf16 patch copies.
    x_bf = x_nchw.astype(jnp.bfloat16)
    patches = lax.conv_general_dilated_patches(
        x_bf, filter_shape=(K, K), window_strides=(1, 1),
        padding=((P, P), (P, P)))                       # (N, Cin*K*K, H, W) bf16
    patches = patches.reshape(N, Kdim, HW)              # contiguous (free)

    w2 = weight.reshape(Cout2, Kdim).astype(jnp.bfloat16)
    b2 = bias.reshape(Cout2, 1).astype(jnp.float32)
    eps = eps_nchw.reshape(N, Cout, HW).astype(jnp.float32)   # contiguous (free)

    def latent_kernel(p_ref, w_ref, b_ref, eps_ref, lat_ref, gp_ref):
        w = w_ref[...]                                   # (2C, Kdim) bf16
        b = b_ref[...]                                   # (2C, 1) f32
        lat_rows = []
        gp_rows = []
        for n in range(N):                               # static unroll; N is tiny
            # One fused MXU matmul for both the means and stds halves; f32 acc.
            out = jnp.dot(w, p_ref[n],
                          preferred_element_type=jnp.float32) + b   # (2C, HW) f32
            means = out[:Cout, :]
            s_raw = out[Cout:, :]
            # PyTorch nn.Softplus (beta=1, threshold=20): x if x > 20 else log1p(exp(x)).
            stds = jnp.where(s_raw > 20.0, s_raw,
                             jnp.log1p(jnp.exp(jnp.minimum(s_raw, 20.0))))
            # gaussian_params = cat((softplus(stds), means), channel axis).
            gp_rows.append(jnp.concatenate([stds, means], axis=0))   # (2C, HW)
            # torch.distributions.Normal(loc=means, scale=means).sample()
            #   == means + means * eps.  NOTE: the module really uses scale=means
            #   (not stds) -- likely an upstream bug, mirrored here faithfully.
            lat_rows.append(means + means * eps_ref[n])              # (C, HW)
        # Single full-block, lane-dense, unmasked stores; row index = n*C + c,
        # so the HBM layout is already NCHW.
        gp_ref[...] = jnp.concatenate(gp_rows, axis=0).astype(gp_ref.dtype)
        lat_ref[...] = jnp.concatenate(lat_rows, axis=0).astype(lat_ref.dtype)

    grid_spec = pltpu.PrefetchScalarGridSpec(
        num_scalar_prefetch=0,
        grid=(1,),   # everything in one step: no per-step pipeline overhead
        in_specs=[
            pl.BlockSpec((N, Kdim, HW), lambda i: (0, 0, 0)),
            pl.BlockSpec((Cout2, Kdim), lambda i: (0, 0)),
            pl.BlockSpec((Cout2, 1), lambda i: (0, 0)),
            pl.BlockSpec((N, Cout, HW), lambda i: (0, 0, 0)),
        ],
        out_specs=[
            pl.BlockSpec((N * Cout, HW), lambda i: (0, 0)),
            pl.BlockSpec((N * Cout2, HW), lambda i: (0, 0)),
        ],
    )

    lat_flat, gp_flat = pl.pallas_call(
        latent_kernel,
        out_shape=(
            jax.ShapeDtypeStruct((N * Cout, HW), out_dtype),    # latent rows: n*C + c
            jax.ShapeDtypeStruct((N * Cout2, HW), out_dtype),   # [stds; means] per n
        ),
        grid_spec=grid_spec,
        compiler_params=pltpu.CompilerParams(
            dimension_semantics=("arbitrary",)),
    )(patches, w2, b2, eps)

    # (N*C, H*W) row-major == NCHW: contiguous reshapes only, no extra HBM pass.
    latent = lat_flat.reshape(N, Cout, H, W)
    gaussian_params = gp_flat.reshape(N, Cout2, H, W)
    return latent, gaussian_params


if __name__ == "__main__":
    # Small shapes consistent with the module: in_channels == out_channels == 4,
    # kernel_size=5, padding=2 (keeps spatial dims).
    N, Cin, H, W = 2, 4, 16, 16
    Cout = Cin
    K = 5
    PAD = 2

    key = jax.random.PRNGKey(0)
    kx, kw_, kb, ke = jax.random.split(key, 4)

    x = jax.random.normal(kx, (N, Cin, H, W), dtype=jnp.float32)
    weight = 0.1 * jax.random.normal(kw_, (2 * Cout, Cin, K, K), dtype=jnp.float32)
    bias = 0.1 * jax.random.normal(kb, (2 * Cout,), dtype=jnp.float32)
    eps = jax.random.normal(ke, (N, Cout, H, W), dtype=jnp.float32)

    latent, gaussian_params = latent_forward(
        x, weight, bias, eps, kernel_size=K, padding=PAD)
    latent, gaussian_params = jax.block_until_ready((latent, gaussian_params))

    # Pure-JAX reference.  The kernel feeds the MXU bf16 inputs (f32 accumulation),
    # so the reference uses the same bf16-rounded x/weight; epilogue stays f32.
    x_r = x.astype(jnp.bfloat16).astype(jnp.float32)
    w_r = weight.astype(jnp.bfloat16).astype(jnp.float32)
    conv_out = lax.conv_general_dilated(
        x_r, w_r, window_strides=(1, 1), padding=((PAD, PAD), (PAD, PAD)),
        dimension_numbers=("NCHW", "OIHW", "NCHW"),
        precision=lax.Precision.HIGHEST,
    ) + bias.reshape(1, -1, 1, 1)
    means_ref = conv_out[:, :Cout]
    stds_ref = jax.nn.softplus(conv_out[:, Cout:])
    latent_ref = means_ref + means_ref * eps
    gp_ref = jnp.concatenate((stds_ref, means_ref), axis=1)

    assert latent.shape == (N, Cout, H, W)
    assert gaussian_params.shape == (N, 2 * Cout, H, W)
    assert jnp.allclose(latent, latent_ref, atol=2e-3, rtol=2e-3)
    assert jnp.allclose(gaussian_params, gp_ref, atol=2e-3, rtol=2e-3)

    print("KERNEL_OK")
</pallas_src>

<mosaic_0001>
module attributes {stable_mosaic.version = 11 : i64} {
  func.func @latent_kernel(%arg0: i32, %arg1: memref<2x100x256xbf16, #tpu.memory_space<vmem>>, %arg2: memref<8x100xbf16, #tpu.memory_space<vmem>>, %arg3: memref<8x1xf32, #tpu.memory_space<vmem>>, %arg4: memref<2x4x256xf32, #tpu.memory_space<vmem>>, %arg5: memref<8x256xf32, #tpu.memory_space<vmem>>, %arg6: memref<16x256xf32, #tpu.memory_space<vmem>>) attributes {dimension_semantics = [#tpu.dimension_semantics<arbitrary>], iteration_bounds = array<i64: 1>, scalar_prefetch = 0 : i64, scratch_operands = 0 : i64, tpu.core_type = #tpu.core_type<tc>, window_params = [{pipeline_mode = #tpu.pipeline_mode<synchronous>, transform_indices = @transform_0, window_bounds = array<i64: 2, 100, 256>}, {pipeline_mode = #tpu.pipeline_mode<synchronous>, transform_indices = @transform_1, window_bounds = array<i64: 8, 100>}, {pipeline_mode = #tpu.pipeline_mode<synchronous>, transform_indices = @transform_2, window_bounds = array<i64: 8, 1>}, {pipeline_mode = #tpu.pipeline_mode<synchronous>, transform_indices = @transform_3, window_bounds = array<i64: 2, 4, 256>}, {pipeline_mode = #tpu.pipeline_mode<synchronous>, transform_indices = @transform_4, window_bounds = array<i64: 8, 256>}, {pipeline_mode = #tpu.pipeline_mode<synchronous>, transform_indices = @transform_5, window_bounds = array<i64: 16, 256>}]} {
    %c0 = arith.constant 0 : index
    %c0_0 = arith.constant 0 : index
    %0 = vector.load %arg2[%c0, %c0_0] : memref<8x100xbf16, #tpu.memory_space<vmem>>, vector<8x100xbf16>
    %c0_1 = arith.constant 0 : index
    %c0_2 = arith.constant 0 : index
    %1 = vector.load %arg3[%c0_1, %c0_2] : memref<8x1xf32, #tpu.memory_space<vmem>>, vector<8x1xf32>
    %c0_3 = arith.constant 0 : index
    %c0_4 = arith.constant 0 : index
    %c0_5 = arith.constant 0 : index
    %2 = vector.load %arg1[%c0_3, %c0_4, %c0_5] : memref<2x100x256xbf16, #tpu.memory_space<vmem>>, vector<1x100x256xbf16>
    %3 = vector.shape_cast %2 : vector<1x100x256xbf16> to vector<100x256xbf16>
    %cst = arith.constant dense<0.000000e+00> : vector<8x256xf32>
    %4 = tpu.matmul %0, %3, %cst {dimension_numbers = #tpu.dot_dimension_numbers<[1], [0], [0], [1], [0, 0, 1, 1], [], []>} : vector<8x100xbf16>, vector<100x256xbf16>, vector<8x256xf32> -> vector<8x256xf32>
    %5 = vector.broadcast %1 : vector<8x1xf32> to vector<8x256xf32>
    %6 = arith.addf %4, %5 : vector<8x256xf32>
    %7 = vector.extract_strided_slice %6 {offsets = [0, 0], sizes = [4, 256], strides = [1, 1]} : vector<8x256xf32> to vector<4x256xf32>
    %8 = vector.extract_strided_slice %6 {offsets = [4, 0], sizes = [4, 256], strides = [1, 1]} : vector<8x256xf32> to vector<4x256xf32>
    %cst_6 = arith.constant 2.000000e+01 : f32
    %9 = vector.broadcast %cst_6 : f32 to vector<4x256xf32>
    %10 = arith.cmpf ogt, %8, %9 : vector<4x256xf32>
    %cst_7 = arith.constant 2.000000e+01 : f32
    %11 = vector.broadcast %cst_7 : f32 to vector<4x256xf32>
    %12 = arith.minimumf %8, %11 : vector<4x256xf32>
    %13 = math.exp %12 : vector<4x256xf32>
    %14 = math.log1p %13 : vector<4x256xf32>
    %15 = arith.select %10, %8, %14 : vector<4x256xi1>, vector<4x256xf32>
    %16 = tpu.concatenate %15, %7 in 0 : vector<4x256xf32>, vector<4x256xf32> -> vector<8x256xf32>
    %c0_8 = arith.constant 0 : index
    %c0_9 = arith.constant 0 : index
    %c0_10 = arith.constant 0 : index
    %17 = vector.load %arg4[%c0_8, %c0_9, %c0_10] : memref<2x4x256xf32, #tpu.memory_space<vmem>>, vector<1x4x256xf32>
    %18 = vector.shape_cast %17 : vector<1x4x256xf32> to vector<4x256xf32>
    %19 = arith.mulf %7, %18 : vector<4x256xf32>
    %20 = arith.addf %7, %19 : vector<4x256xf32>
    %c1 = arith.constant 1 : index
    %c0_11 = arith.constant 0 : index
    %c0_12 = arith.constant 0 : index
    %21 = vector.load %arg1[%c1, %c0_11, %c0_12] : memref<2x100x256xbf16, #tpu.memory_space<vmem>>, vector<1x100x256xbf16>
    %22 = vector.shape_cast %21 : vector<1x100x256xbf16> to vector<100x256xbf16>
    %cst_13 = arith.constant dense<0.000000e+00> : vector<8x256xf32>
    %23 = tpu.matmul %0, %22, %cst_13 {dimension_numbers = #tpu.dot_dimension_numbers<[1], [0], [0], [1], [0, 0, 1, 1], [], []>} : vector<8x100xbf16>, vector<100x256xbf16>, vector<8x256xf32> -> vector<8x256xf32>
    %24 = vector.broadcast %1 : vector<8x1xf32> to vector<8x256xf32>
    %25 = arith.addf %23, %24 : vector<8x256xf32>
    %26 = vector.extract_strided_slice %25 {offsets = [0, 0], sizes = [4, 256], strides = [1, 1]} : vector<8x256xf32> to vector<4x256xf32>
    %27 = vector.extract_strided_slice %25 {offsets = [4, 0], sizes = [4, 256], strides = [1, 1]} : vector<8x256xf32> to vector<4x256xf32>
    %cst_14 = arith.constant 2.000000e+01 : f32
    %28 = vector.broadcast %cst_14 : f32 to vector<4x256xf32>
    %29 = arith.cmpf ogt, %27, %28 : vector<4x256xf32>
    %cst_15 = arith.constant 2.000000e+01 : f32
    %30 = vector.broadcast %cst_15 : f32 to vector<4x256xf32>
    %31 = arith.minimumf %27, %30 : vector<4x256xf32>
    %32 = math.exp %31 : vector<4x256xf32>
    %33 = math.log1p %32 : vector<4x256xf32>
    %34 = arith.select %29, %27, %33 : vector<4x256xi1>, vector<4x256xf32>
    %35 = tpu.concatenate %34, %26 in 0 : vector<4x256xf32>, vector<4x256xf32> -> vector<8x256xf32>
    %c1_16 = arith.constant 1 : index
    %c0_17 = arith.constant 0 : index
    %c0_18 = arith.constant 0 : index
    %36 = vector.load %arg4[%c1_16, %c0_17, %c0_18] : memref<2x4x256xf32, #tpu.memory_space<vmem>>, vector<1x4x256xf32>
    %37 = vector.shape_cast %36 : vector<1x4x256xf32> to vector<4x256xf32>
    %38 = arith.mulf %26, %37 : vector<4x256xf32>
    %39 = arith.addf %26, %38 : vector<4x256xf32>
    %40 = tpu.concatenate %16, %35 in 0 : vector<8x256xf32>, vector<8x256xf32> -> vector<16x256xf32>
    %c0_19 = arith.constant 0 : index
    %c0_20 = arith.constant 0 : index
    %41 = vector.load %arg6[%c0_19, %c0_20] : memref<16x256xf32, #tpu.memory_space<vmem>>, vector<16x256xf32>
    tpu.vector_store %arg6[%c0_19, %c0_20], %40 {strides = array<i32>} : memref<16x256xf32, #tpu.memory_space<vmem>>, vector<16x256xf32>,
    %42 = tpu.concatenate %20, %39 in 0 : vector<4x256xf32>, vector<4x256xf32> -> vector<8x256xf32>
    %c0_21 = arith.constant 0 : index
    %c0_22 = arith.constant 0 : index
    %43 = vector.load %arg5[%c0_21, %c0_22] : memref<8x256xf32, #tpu.memory_space<vmem>>, vector<8x256xf32>
    tpu.vector_store %arg5[%c0_21, %c0_22], %42 {strides = array<i32>} : memref<8x256xf32, #tpu.memory_space<vmem>>, vector<8x256xf32>,
    return
  }
  func.func @transform_0(%arg0: i32) -> (i32, i32, i32) {
    %c0_i32 = arith.constant 0 : i32
    %c0_i32_0 = arith.constant 0 : i32
    %c0_i32_1 = arith.constant 0 : i32
    %c0_i32_2 = arith.constant 0 : i32
    return %c0_i32, %c0_i32_0, %c0_i32_1 : i32, i32, i32
  }
  func.func @transform_1(%arg0: i32) -> (i32, i32) {
    %c0_i32 = arith.constant 0 : i32
    %c0_i32_0 = arith.constant 0 : i32
    %c0_i32_1 = arith.constant 0 : i32
    return %c0_i32, %c0_i32_0 : i32, i32
  }
  func.func @transform_2(%arg0: i32) -> (i32, i32) {
    %c0_i32 = arith.constant 0 : i32
    %c0_i32_0 = arith.constant 0 : i32
    %c0_i32_1 = arith.constant 0 : i32
    return %c0_i32, %c0_i32_0 : i32, i32
  }
  func.func @transform_3(%arg0: i32) -> (i32, i32, i32) {
    %c0_i32 = arith.constant 0 : i32
    %c0_i32_0 = arith.constant 0 : i32
    %c0_i32_1 = arith.constant 0 : i32
    %c0_i32_2 = arith.constant 0 : i32
    return %c0_i32, %c0_i32_0, %c0_i32_1 : i32, i32, i32
  }
  func.func @transform_4(%arg0: i32) -> (i32, i32) {
    %c0_i32 = arith.constant 0 : i32
    %c0_i32_0 = arith.constant 0 : i32
    %c0_i32_1 = arith.constant 0 : i32
    return %c0_i32, %c0_i32_0 : i32, i32
  }
  func.func @transform_5(%arg0: i32) -> (i32, i32) {
    %c0_i32 = arith.constant 0 : i32
    %c0_i32_0 = arith.constant 0 : i32
    %c0_i32_1 = arith.constant 0 : i32
    return %c0_i32, %c0_i32_0 : i32, i32
  }
}

</mosaic_0001>

<llo_original>
// kernel: tpu_custom_call.1
$region0: #{tpu_custom_call.1}
  #allocation0 [shape = 'u32[]', space=smem, size = 0x4, offset = 0x4, fixed_abs, tag = 'smem constant byte address 0x4 - core index']
  #allocation1 [shape = 'u32[72,128]{1,0:T(1,128)}', space=vmem, size = 0x9000, scoped, tag = 'internal scratch']
  %s0 = inlined_call_operand.vmem [shape: bf16[2,100,256], index: 0, kind: input, shape index: {}]
  %s1 = inlined_call_operand.vmem [shape: bf16[8,100], index: 1, kind: input, shape index: {}]
  %s2 = inlined_call_operand.vmem [shape: f32[8,1], index: 2, kind: input, shape index: {}]
  %s3 = inlined_call_operand.vmem [shape: f32[2,4,256], index: 3, kind: input, shape index: {}]
  %s4 = inlined_call_operand.hbm [shape: f32[8,256], index: 4, kind: output, shape index: {0}]
  %s5 = inlined_call_operand.hbm [shape: f32[16,256], index: 5, kind: output, shape index: {1}]
  %6 = xla_tuple %s4, %s5
  %s7 = sld [smem:[#allocation0]]
  $region34: #{tpu_custom_call.1} parent=0
    _
  %s9 = ssub.s32 1, %s7
  %s10 = scalar_select 0, %s9, %s7
  $region1: #{tpu_custom_call.1} parent=0
    #allocation2 [shape = 'u8[8192]{0}', space=vmem, size = 0x2000, scoped, tag = 'output window, operand 0, single buffered']
    #allocation3 [shape = 's32[1]{0}', space=sflag, size = 0x4, scoped, tag = 'scoped memory for tpu_custom_call.1']
    #allocation4 [shape = 'u8[16384]{0}', space=vmem, size = 0x4000, scoped, tag = 'output window, operand 1, single buffered']
    #allocation5 [shape = 's32[1]{0}', space=sflag, size = 0x4, scoped, tag = 'scoped memory for tpu_custom_call.1']
    %11 = vsyncpa [#allocation3], 0
    %12 = vsyncpa [#allocation5], 0
    // Predicated region
    $region2: #{tpu_custom_call.1} parent=1 // pred_check
      _
    $region3: #{tpu_custom_call.1} parent=1 // pred_check_branch
      %14 = sbr.rel (0) target = $region5
    $region4: #{tpu_custom_call.1} parent=1 // pred_region
      _
    $region5: #{tpu_custom_call.1} parent=1 // pred_fallthru
      _
    // Predicated region
    $region6: #{tpu_custom_call.1} parent=1 // pred_check
      _
    $region7: #{tpu_custom_call.1} parent=1 // pred_check_branch
      %16 = sbr.rel (0) target = $region9
    $region8: #{tpu_custom_call.1} parent=1 // pred_region
      _
    $region9: #{tpu_custom_call.1} parent=1 // pred_fallthru
      _
    // Predicated region
    $region10: #{tpu_custom_call.1} parent=1 // pred_check
      _
    $region11: #{tpu_custom_call.1} parent=1 // pred_check_branch
      %18 = sbr.rel (0) target = $region13
    $region12: #{tpu_custom_call.1} parent=1 // pred_region
      _
    $region13: #{tpu_custom_call.1} parent=1 // pred_fallthru
      _
    // Predicated region
    $region14: #{tpu_custom_call.1} parent=1 // pred_check
      _
    $region15: #{tpu_custom_call.1} parent=1 // pred_check_branch
      %20 = sbr.rel (0) target = $region17
    $region16: #{tpu_custom_call.1} parent=1 // pred_region
      _
    $region17: #{tpu_custom_call.1} parent=1 // pred_fallthru
      _
    %v22 = vld [vmem:[%s1] sm:$0xf]
    %v23 = vld [vmem:[%s2] sm:$0xff]
    %v24 = vld [vmem:[%s0] sm:$0xff]
    %v25 = vld [vmem:[%s0 + $0x8] sm:$0xff]
    %v26 = vld [vmem:[%s0 + $0x10] sm:$0xff]
    %v27 = vld [vmem:[%s0 + $0x18] sm:$0xff]
    %v28 = vld [vmem:[%s0 + $0x20] sm:$0xff]
    %v29 = vld [vmem:[%s0 + $0x28] sm:$0xff]
    %v30 = vld [vmem:[%s0 + $0x30] sm:$0xff]
    %v31 = vld [vmem:[%s0 + $0x38] sm:$0xff]
    %v32 = vld [vmem:[%s0 + $0x40] sm:$0xff]
    %v33 = vld [vmem:[%s0 + $0x48] sm:$0xff]
    %v34 = vld [vmem:[%s0 + $0x50] sm:$0xff]
    %v35 = vld [vmem:[%s0 + $0x58] sm:$0xff]
    %v36 = vld [vmem:[%s0 + $0x60] sm:$0x33]
    %38 = vset.pattern.permute.xlu0 0
    %39 = vperm.xlu0 %38, %v23
    %v40 = vpop.permute.xlu0 %39
    %v55 = vunpack.c.l.b16 %v24
    %v56 = vunpack.c.h.b16 %v24
    %v57 = vunpack.c.l.b16 %v25
    %v58 = vunpack.c.h.b16 %v25
    %v59 = vunpack.c.l.b16 %v26
    %v60 = vunpack.c.h.b16 %v26
    %v61 = vunpack.c.l.b16 %v27
    %v62 = vunpack.c.h.b16 %v27
    %v63 = vunpack.c.l.b16 %v28
    %v64 = vunpack.c.h.b16 %v28
    %v65 = vunpack.c.l.b16 %v29
    %v66 = vunpack.c.h.b16 %v29
    %v67 = vunpack.c.l.b16 %v30
    %v68 = vunpack.c.h.b16 %v30
    %v69 = vunpack.c.l.b16 %v31
    %v70 = vunpack.c.h.b16 %v31
    %v71 = vunpack.c.l.b16 %v32
    %v72 = vunpack.c.h.b16 %v32
    %v73 = vunpack.c.l.b16 %v33
    %v74 = vunpack.c.h.b16 %v33
    %v75 = vunpack.c.l.b16 %v34
    %v76 = vunpack.c.h.b16 %v34
    %v77 = vunpack.c.l.b16 %v35
    %v78 = vunpack.c.h.b16 %v35
    %v79 = vunpack.c.l.b16 %v36
    %v80 = vunpack.c.h.b16 %v36
    %v81 = vpack.c.b16 %v57, %v55
    %v82 = vpack.c.b16 %v58, %v56
    %v83 = vpack.c.b16 %v61, %v59
    %v84 = vpack.c.b16 %v62, %v60
    %v85 = vpack.c.b16 %v65, %v63
    %v86 = vpack.c.b16 %v66, %v64
    %v87 = vpack.c.b16 %v69, %v67
    %v88 = vpack.c.b16 %v70, %v68
    %v89 = vpack.c.b16 %v73, %v71
    %v90 = vpack.c.b16 %v74, %v72
    %v91 = vpack.c.b16 %v77, %v75
    %v92 = vpack.c.b16 %v78, %v76
    %v93 = vpack.c.b16 %v79, %v79
    %v94 = vpack.c.b16 %v80, %v80
    %vm107 = vcmask 818176
    %v109 = vsel %vm107, %v22, 0
    %vm111 = vcmask 1041408
    %v113 = vsel %vm111, %v93, 0
    %v116 = vsel %vm111, %v94, 0
    %118 = vmatpush.bf16.msra.mxu0 0
    %119 = vmatpush.bf16.msra.mxu0 %v113
    %120 = vmatpush.bf16.msra.mxu0 %v91
    %121 = vmatpush.bf16.msra.mxu0 %v89
    %122 = vmatpush.bf16.msra.mxu0 %v87
    %123 = vmatpush.bf16.msra.mxu0 %v85
    %124 = vmatpush.bf16.msra.mxu0 %v83
    %125 = vmatpush.bf16.msra.mxu0 %v81
    %126 = vmatmul.bf16.gmra.mxu0 %v109
    %v127 = vpop.f32.mrf.mxu0
    %v128 = vadd.f32 %v40, %v127
    %v129 = vpop.f32.mrf.mxu0
    %130 = vdwg.mxu0
    %131 = vmatpush.bf16.msra.mxu0 0
    %132 = vmatpush.bf16.msra.mxu0 %v116
    %133 = vmatpush.bf16.msra.mxu0 %v92
    %134 = vmatpush.bf16.msra.mxu0 %v90
    %135 = vmatpush.bf16.msra.mxu0 %v88
    %136 = vmatpush.bf16.msra.mxu0 %v86
    %137 = vmatpush.bf16.msra.mxu0 %v84
    %138 = vmatpush.bf16.msra.mxu0 %v82
    %139 = vmatmul.bf16.gmra.mxu0 %v109
    %v140 = vpop.f32.mrf.mxu0
    %v141 = vadd.f32 %v40, %v140
    %v142 = vpop.f32.mrf.mxu0
    %143 = vdwg.mxu0
    %vm144 = vcmp.gt.f32.partialorder %v128, 20.0
    %vm145 = vcmp.gt.f32.partialorder %v141, 20.0
    %v146 = vmin.f32 %v128, 20.0
    %v147 = vmin.f32 %v141, 20.0
    %v148 = vmul.f32 %v146, 1.442695
    %v149 = vpow.pop %v148
    %v150 = vmul.f32 %v147, 1.442695
    %v151 = vpow.pop %v150
    %v152 = vadd.f32 %v149, 1.0
    %v153 = vlog2.pop %v152
    %v154 = vmul.f32 %v153, 0.6931472
    %v155 = vmul.f32 -0.5, %v149
    %v156 = vadd.f32 %v155, 1.0
    %v157 = vmul.f32 %v156, %v149
    %v158 = vand.u32 2147483647, %v149
    %vm159 = vcmp.lt.f32.partialorder %v158, 0.0004427343
    %v160 = vsel %vm159, %v157, %v154
    %v161 = vadd.f32 %v151, 1.0
    %v162 = vlog2.pop %v161
    %v163 = vmul.f32 %v162, 0.6931472
    %v164 = vmul.f32 -0.5, %v151
    %v165 = vadd.f32 %v164, 1.0
    %v166 = vmul.f32 %v165, %v151
    %v167 = vand.u32 2147483647, %v151
    %vm168 = vcmp.lt.f32.partialorder %v167, 0.0004427343
    %v169 = vsel %vm168, %v166, %v163
    %v170 = vsel %vm144, %v128, %v160
    %v171 = vsel %vm145, %v141, %v169
    %v174 = vrot.slane %v170, 4
    %v175 = vrot.slane %v171, 4
    %v180 = vrot.slane %v128, 4
    %v181 = vrot.slane %v141, 4
    %vm184 = vcmask 1043456
    %v185 = vsel %vm184, %v174, %v180
    %v186 = vsel %vm184, %v175, %v181
    %v187 = vld [vmem:[%s3] sm:$0xff]
    %189 = vst [vmem:[#allocation1] ss:$2 sm:$0xff] %v187
    %v190 = vld.sshfl [vmem:[#allocation1] sm:$0xff pattern:$0x75316420]
    %v191 = vld.sshfl [vmem:[#allocation1 + $0x8] sm:$0xff pattern:$0x75316420]
    %v194 = vmul.f32 %v128, %v190
    %v195 = vmul.f32 %v141, %v191
    %v196 = vadd.f32 %v128, %v194
    %v197 = vadd.f32 %v141, %v195
    %s198 = scalar_lea.vmem %s0, 104
    %v199 = vld [vmem:[%s198] sm:$0xff]
    %v200 = vld [vmem:[%s198 + $0x8] sm:$0xff]
    %v201 = vld [vmem:[%s198 + $0x10] sm:$0xff]
    %v202 = vld [vmem:[%s198 + $0x18] sm:$0xff]
    %v203 = vld [vmem:[%s198 + $0x20] sm:$0xff]
    %v204 = vld [vmem:[%s198 + $0x28] sm:$0xff]
    %v205 = vld [vmem:[%s198 + $0x30] sm:$0xff]
    %v206 = vld [vmem:[%s198 + $0x38] sm:$0xff]
    %v207 = vld [vmem:[%s198 + $0x40] sm:$0xff]
    %v208 = vld [vmem:[%s198 + $0x48] sm:$0xff]
    %v209 = vld [vmem:[%s198 + $0x50] sm:$0xff]
    %v210 = vld [vmem:[%s198 + $0x58] sm:$0xff]
    %v211 = vld [vmem:[%s198 + $0x60] sm:$0x33]
    %v225 = vunpack.c.l.b16 %v199
    %v226 = vunpack.c.h.b16 %v199
    %v227 = vunpack.c.l.b16 %v200
    %v228 = vunpack.c.h.b16 %v200
    %v229 = vunpack.c.l.b16 %v201
    %v230 = vunpack.c.h.b16 %v201
    %v231 = vunpack.c.l.b16 %v202
    %v232 = vunpack.c.h.b16 %v202
    %v233 = vunpack.c.l.b16 %v203
    %v234 = vunpack.c.h.b16 %v203
    %v235 = vunpack.c.l.b16 %v204
    %v236 = vunpack.c.h.b16 %v204
    %v237 = vunpack.c.l.b16 %v205
    %v238 = vunpack.c.h.b16 %v205
    %v239 = vunpack.c.l.b16 %v206
    %v240 = vunpack.c.h.b16 %v206
    %v241 = vunpack.c.l.b16 %v207
    %v242 = vunpack.c.h.b16 %v207
    %v243 = vunpack.c.l.b16 %v208
    %v244 = vunpack.c.h.b16 %v208
    %v245 = vunpack.c.l.b16 %v209
    %v246 = vunpack.c.h.b16 %v209
    %v247 = vunpack.c.l.b16 %v210
    %v248 = vunpack.c.h.b16 %v210
    %v249 = vunpack.c.l.b16 %v211
    %v250 = vunpack.c.h.b16 %v211
    %v251 = vpack.c.b16 %v227, %v225
    %v252 = vpack.c.b16 %v228, %v226
    %v253 = vpack.c.b16 %v231, %v229
    %v254 = vpack.c.b16 %v232, %v230
    %v255 = vpack.c.b16 %v235, %v233
    %v256 = vpack.c.b16 %v236, %v234
    %v257 = vpack.c.b16 %v239, %v237
    %v258 = vpack.c.b16 %v240, %v238
    %v259 = vpack.c.b16 %v243, %v241
    %v260 = vpack.c.b16 %v244, %v242
    %v261 = vpack.c.b16 %v247, %v245
    %v262 = vpack.c.b16 %v248, %v246
    %v263 = vpack.c.b16 %v249, %v249
    %v264 = vpack.c.b16 %v250, %v250
    %v278 = vsel %vm111, %v263, 0
    %v281 = vsel %vm111, %v264, 0
    %283 = vmatpush.bf16.msra.mxu0 0
    %284 = vmatpush.bf16.msra.mxu0 %v278
    %285 = vmatpush.bf16.msra.mxu0 %v261
    %286 = vmatpush.bf16.msra.mxu0 %v259
    %287 = vmatpush.bf16.msra.mxu0 %v257
    %288 = vmatpush.bf16.msra.mxu0 %v255
    %289 = vmatpush.bf16.msra.mxu0 %v253
    %290 = vmatpush.bf16.msra.mxu0 %v251
    %291 = vmatmul.bf16.gmra.mxu0 %v109
    %v292 = vpop.f32.mrf.mxu0
    %v293 = vadd.f32 %v40, %v292
    %v294 = vpop.f32.mrf.mxu0
    %295 = vdwg.mxu0
    %296 = vmatpush.bf16.msra.mxu0 0
    %297 = vmatpush.bf16.msra.mxu0 %v281
    %298 = vmatpush.bf16.msra.mxu0 %v262
    %299 = vmatpush.bf16.msra.mxu0 %v260
    %300 = vmatpush.bf16.msra.mxu0 %v258
    %301 = vmatpush.bf16.msra.mxu0 %v256
    %302 = vmatpush.bf16.msra.mxu0 %v254
    %303 = vmatpush.bf16.msra.mxu0 %v252
    %304 = vmatmul.bf16.gmra.mxu0 %v109
    %v305 = vpop.f32.mrf.mxu0
    %v306 = vadd.f32 %v40, %v305
    %v307 = vpop.f32.mrf.mxu0
    %308 = vdwg.mxu0
    %vm309 = vcmp.gt.f32.partialorder %v293, 20.0
    %vm310 = vcmp.gt.f32.partialorder %v306, 20.0
    %v311 = vmin.f32 %v293, 20.0
    %v312 = vmin.f32 %v306, 20.0
    %v313 = vmul.f32 %v311, 1.442695
    %v314 = vpow.pop %v313
    %v315 = vmul.f32 %v312, 1.442695
    %v316 = vpow.pop %v315
    %v317 = vadd.f32 %v314, 1.0
    %v318 = vlog2.pop %v317
    %v319 = vmul.f32 %v318, 0.6931472
    %v320 = vmul.f32 -0.5, %v314
    %v321 = vadd.f32 %v320, 1.0
    %v322 = vmul.f32 %v321, %v314
    %v323 = vand.u32 2147483647, %v314
    %vm324 = vcmp.lt.f32.partialorder %v323, 0.0004427343
    %v325 = vsel %vm324, %v322, %v319
    %v326 = vadd.f32 %v316, 1.0
    %v327 = vlog2.pop %v326
    %v328 = vmul.f32 %v327, 0.6931472
    %v329 = vmul.f32 -0.5, %v316
    %v330 = vadd.f32 %v329, 1.0
    %v331 = vmul.f32 %v330, %v316
    %v332 = vand.u32 2147483647, %v316
    %vm333 = vcmp.lt.f32.partialorder %v332, 0.0004427343
    %v334 = vsel %vm333, %v331, %v328
    %v335 = vsel %vm309, %v293, %v325
    %v336 = vsel %vm310, %v306, %v334
    %v339 = vrot.slane %v335, 4
    %v340 = vrot.slane %v336, 4
    %v345 = vrot.slane %v293, 4
    %v346 = vrot.slane %v306, 4
    %v349 = vsel %vm184, %v339, %v345
    %v350 = vsel %vm184, %v340, %v346
    %s351 = scalar_lea.vmem %s3, 8
    %v352 = vld [vmem:[%s351] sm:$0xff]
    %354 = vst [vmem:[#allocation1] ss:$2 sm:$0xff] %v352
    %v355 = vld.sshfl [vmem:[#allocation1] sm:$0xff pattern:$0x75316420]
    %v356 = vld.sshfl [vmem:[#allocation1 + $0x8] sm:$0xff pattern:$0x75316420]
    %v359 = vmul.f32 %v293, %v355
    %v360 = vmul.f32 %v306, %v356
    %v361 = vadd.f32 %v293, %v359
    %v362 = vadd.f32 %v306, %v360
    %363 = vst [vmem:[#allocation4] sm:$0xff] %v185
    %364 = vst [vmem:[#allocation4 + $0x8] sm:$0xff] %v186
    %365 = vst [vmem:[#allocation4 + $0x10] sm:$0xff] %v349
    %366 = vst [vmem:[#allocation4 + $0x18] sm:$0xff] %v350
    %v369 = vrot.slane %v361, 4
    %v370 = vrot.slane %v362, 4
    %v373 = vsel %vm184, %v196, %v369
    %v374 = vsel %vm184, %v197, %v370
    %375 = vst [vmem:[#allocation2] sm:$0xff] %v373
    %376 = vst [vmem:[#allocation2 + $0x8] sm:$0xff] %v374
    // Predicated region
    $region18: #{tpu_custom_call.1} parent=1 // pred_check
      _
    $region19: #{tpu_custom_call.1} parent=1 // pred_check_branch
      %378 = sbr.rel (0) target = $region21
    $region20: #{tpu_custom_call.1} parent=1 // pred_region
      %380 = vsyncadd [#allocation3], 0
      %s382 = sshll.u32 [#allocation2], 4
      %s383 = int_to_ptr.vmem [resolvable:$true] %s382
      %s384 = sshll.u32 %s4, 4
      %s385 = int_to_ptr.hbm [resolvable:$true] %s384
      %387 = dma.vmem_to_hbm [thread:$0]  %s383, 256, %s385, [#allocation3]
    $region21: #{tpu_custom_call.1} parent=1 // pred_fallthru
      _
    // Predicated region
    $region22: #{tpu_custom_call.1} parent=1 // pred_check
      _
    $region23: #{tpu_custom_call.1} parent=1 // pred_check_branch
      %389 = sbr.rel (0) target = $region25
    $region24: #{tpu_custom_call.1} parent=1 // pred_region
      %391 = vsyncadd [#allocation5], 0
      %s392 = sshll.u32 [#allocation4], 4
      %s393 = int_to_ptr.vmem [resolvable:$true] %s392
      %s394 = sshll.u32 %s5, 4
      %s395 = int_to_ptr.hbm [resolvable:$true] %s394
      %400 = dma.vmem_to_hbm [thread:$0]  %s393, 512, %s395, [#allocation5], 256, 256, 16
    $region25: #{tpu_custom_call.1} parent=1 // pred_fallthru
      _
    // Predicated region
    $region26: #{tpu_custom_call.1} parent=1 // pred_check
      _
    $region27: #{tpu_custom_call.1} parent=1 // pred_check_branch
      %402 = sbr.rel (0) target = $region29
    $region28: #{tpu_custom_call.1} parent=1 // pred_region
      %404 = dma.done [#allocation3], 256
    $region29: #{tpu_custom_call.1} parent=1 // pred_fallthru
      _
    // Predicated region
    $region30: #{tpu_custom_call.1} parent=1 // pred_check
      _
    $region31: #{tpu_custom_call.1} parent=1 // pred_check_branch
      %406 = sbr.rel (0) target = $region33
    $region32: #{tpu_custom_call.1} parent=1 // pred_region
      %408 = dma.done [#allocation5], 512
    $region33: #{tpu_custom_call.1} parent=1 // pred_fallthru
      _
    %409 = vsyncpa [#allocation3], 1
    %410 = vsyncpa [#allocation5], 1

</llo_original>
